<compile_context>
chip_gen: v5e
topology: v5e:2x2
jax: 0.10.0
libtpu: 0.0.40
codegen_flags: <defaults>
</compile_context>

<pallas_src>
import functools

import numpy as np
import jax
import jax.numpy as jnp
from jax import lax
from jax.experimental import pallas as pl
from jax.experimental.pallas import tpu as pltpu


def _upblock_kernel(x_ref, *rest, skip_scale, add_skip, activation, apply_act):
    """One (batch, L-tile) grid step.

    refs:
      x_ref     : (1, C, Lt)
      skip_ref  : (1, C, Lt)          [only if add_skip]
      halo_ref  : (1, 1, C, 2)  f32   columns x_eff[:, t*Lt-1], x_eff[:, (t+1)*Lt]
                                      (replicated at the global edges)
      wl/wm/wr  : (f*out_c, C)        folded (upsample o conv) taps, phase-major
      b_ref     : (f*out_c, 1)  f32   bias (replicated per phase)
      wlfix/wrfix: (f*out_c, C)       conv zero-pad boundary fixup weights
      o_ref     : (1, f*out_c, Lt)    phase-major output tile
    """
    if add_skip:
        (skip_ref, halo_ref, wl_ref, wm_ref, wr_ref, b_ref,
         wlfix_ref, wrfix_ref, o_ref) = rest
    else:
        (halo_ref, wl_ref, wm_ref, wr_ref, b_ref,
         wlfix_ref, wrfix_ref, o_ref) = rest

    t = pl.program_id(1)
    is_first = t == 0
    is_last = t == pl.num_programs(1) - 1

    # Skip-add in f32 on the VPU.
    # TODO(synk): ConditionEmbedder and ResNetBlock definitions are not
    # provided by the reference module; treated as identity (noise_scale
    # unused).
    x = x_ref[0].astype(jnp.float32)                                  # (C, Lt)
    if add_skip:
        x = x + jnp.float32(skip_scale) * skip_ref[0].astype(jnp.float32)

    c_dim, l_t = x.shape
    halo = halo_ref[0, 0].astype(jnp.float32)                         # (C, 2)

    # Neighbour columns via XLU lane-roll; only the wrapped column is patched
    # (with the halo / replicate column) via a single-lane select -- no
    # full-slab concat copies through the vector-store slot.
    lane = lax.broadcasted_iota(jnp.int32, (c_dim, l_t), 1)
    x_left = jnp.where(lane == 0, halo[:, 0:1],
                       pltpu.roll(x, shift=1, axis=1))                # x[:, j-1]
    x_right = jnp.where(lane == l_t - 1, halo[:, 1:2],
                        pltpu.roll(x, shift=l_t - 1, axis=1))         # x[:, j+1]

    # Cast to the MXU compute dtype (bf16 by default) only at the matmul
    # boundary (v5e has no bf16 VPU).
    cdt = wm_ref.dtype
    xc, xl, xr = x.astype(cdt), x_left.astype(cdt), x_right.astype(cdt)

    # Upsample(linear, align_corners=False) + Conv1d(k=3, pad=1) folded into
    # the weights: three accumulating matmuls, no (3C, f*L) stacked RHS slab.
    acc = jnp.dot(wm_ref[...], xc, preferred_element_type=jnp.float32)
    acc += jnp.dot(wl_ref[...], xl, preferred_element_type=jnp.float32)
    acc += jnp.dot(wr_ref[...], xr, preferred_element_type=jnp.float32)

    # Conv zero-padding fixup: the folded form implicitly feeds a replicated
    # neighbour where the conv should see a zero-padded one; this only affects
    # the global first and last output columns.  Tiny matvecs + 1-lane selects.
    col = lax.broadcasted_iota(jnp.int32, acc.shape, 1)
    corr0 = jnp.dot(wlfix_ref[...], xc[:, 0:1],
                    preferred_element_type=jnp.float32)               # (f*out_c, 1)
    corrl = jnp.dot(wrfix_ref[...], xc[:, l_t - 1:l_t],
                    preferred_element_type=jnp.float32)
    acc -= jnp.where((col == 0) & is_first, corr0, 0.0)
    acc -= jnp.where((col == l_t - 1) & is_last, corrl, 0.0)

    acc += b_ref[...]                                                 # bias

    if apply_act:
        # TODO(synk): the PyTorch module takes `activation` as a constructor;
        # not specified in the reference -> static switch, default ReLU.
        if activation == "relu":
            acc = jnp.maximum(acc, 0.0)
        elif activation in ("silu", "swish"):
            acc = acc * jax.nn.sigmoid(acc)
        elif activation != "identity":
            raise NotImplementedError(activation)

    o_ref[0] = acc.astype(o_ref.dtype)


def _pick_l_tile(seq_len, max_cols):
    """Largest Lt that divides seq_len, is a multiple of 128 and fits the
    per-step VMEM column budget; falls back to a single tile."""
    if seq_len <= max(max_cols, 128) or seq_len % 128 != 0:
        return seq_len
    t = (min(max_cols, seq_len) // 128) * 128
    while t >= 128:
        if seq_len % t == 0:
            return t
        t -= 128
    return seq_len


def upblock_forward(x, noise_scale, skip, conv_w, conv_b, *, factor,
                    num_resnets=2, skip_co=True, last=False,
                    activation="relu", compute_dtype=jnp.bfloat16,
                    l_tile=None):
    """Pallas forward for UpBlock.

    x, skip: (B, C, L); noise_scale: (B, 512); conv_w: (out_c, C, 3);
    conv_b: (out_c,).  Returns (B, out_c, L*factor).
    """
    del noise_scale  # consumed only by the (unavailable) ConditionEmbedder
    B, C, L = x.shape
    out_c = conv_w.shape[0]
    f = int(factor)
    skip_scale = (1.0 / np.sqrt(2.0)) if num_resnets > 3 else 1.0

    # ---- Fold Upsample(linear, align_corners=False) into the conv taps ----
    # Output column j*f + p is a fixed per-phase 3-tap FIR over x[:, j-1..j+1]:
    #   conv(upsample(x)) == sum_off W_eff[off] @ shift(x, off)
    d = (np.arange(f, dtype=np.float64) + 0.5) / f - 0.5
    a = np.where(d < 0, -d, 0.0)          # weight on x[j-1]
    b = np.where(d < 0, 1.0 + d, 1.0 - d)  # weight on x[j]
    c = np.where(d < 0, 0.0, d)           # weight on x[j+1]
    A = np.zeros((f, 3, 3), np.float64)   # [phase, conv tap, x offset(-1,0,+1)]
    for p in range(f):
        A[p, 1] = (a[p], b[p], c[p])                        # mid tap: u(p, j)
        A[p, 0] = ((a[p - 1], b[p - 1], c[p - 1]) if p > 0
                   else (b[f - 1], c[f - 1], 0.0))          # left : u(f-1, j-1)
        A[p, 2] = ((a[p + 1], b[p + 1], c[p + 1]) if p < f - 1
                   else (0.0, a[0], b[0]))                  # right: u(0, j+1)
    A = jnp.asarray(A, jnp.float32)
    cw = conv_w.astype(jnp.float32)
    # w_eff[p, s, o, c] = sum_t cw[o, c, t] * A[p, t, s]
    w_eff = jnp.einsum("oct,pts->psoc", cw, A)              # (f, 3, out_c, C)
    w_left = w_eff[:, 0].reshape(f * out_c, C).astype(compute_dtype)
    w_mid = w_eff[:, 1].reshape(f * out_c, C).astype(compute_dtype)
    w_right = w_eff[:, 2].reshape(f * out_c, C).astype(compute_dtype)

    # Zero-pad boundary fixup weights (only phase-0 / phase-(f-1) rows nonzero).
    zpad = jnp.zeros(((f - 1) * out_c, C), jnp.float32)
    w_lfix = jnp.concatenate([cw[:, :, 0], zpad], axis=0).astype(compute_dtype)
    w_rfix = jnp.concatenate([zpad, cw[:, :, 2]], axis=0).astype(compute_dtype)
    bias = jnp.tile(conv_b.astype(jnp.float32), f).reshape(f * out_c, 1)

    # ---- VMEM budget + L tiling ----
    phys_vmem = 64 * 2 ** 20
    try:
        phys_vmem = int(getattr(pltpu.get_tpu_info(), "vmem_capacity_bytes",
                                phys_vmem))
    except Exception:
        pass
    vmem_limit = int(0.75 * phys_vmem)       # headroom for compiler scratch (v7x)
    csz = jnp.dtype(compute_dtype).itemsize
    bytes_per_col = ((2 if skip_co else 1) * 2 * C * 4       # pipelined inputs
                     + 2 * f * out_c * 4                      # pipelined output
                     + C * (3 * 4 + 4 + 3 * csz)              # in-kernel slabs
                     + f * out_c * 12)                        # acc + temporaries
    if l_tile is None:
        l_tile = _pick_l_tile(L, int(0.6 * vmem_limit) // max(bytes_per_col, 1))
    assert L % l_tile == 0 and (l_tile == L or l_tile % 128 == 0), (L, l_tile)
    n_t = L // l_tile

    # ---- Halo columns (post skip-add); tiny wrapper-side gather ----
    left_idx = np.concatenate(([0], np.arange(1, n_t) * l_tile - 1)).astype(np.int32)
    right_idx = np.concatenate((np.arange(1, n_t) * l_tile, [L - 1])).astype(np.int32)
    xl_cols = x[:, :, left_idx].astype(jnp.float32)
    xr_cols = x[:, :, right_idx].astype(jnp.float32)
    if skip_co:
        s32 = skip.astype(jnp.float32)
        xl_cols = xl_cols + jnp.float32(skip_scale) * s32[:, :, left_idx]
        xr_cols = xr_cols + jnp.float32(skip_scale) * s32[:, :, right_idx]
    halo = jnp.stack([xl_cols, xr_cols], axis=-1).transpose(0, 2, 1, 3)  # (B,n_t,C,2)

    kernel = functools.partial(
        _upblock_kernel, skip_scale=float(skip_scale), add_skip=bool(skip_co),
        activation=activation, apply_act=not last)

    x_spec = pl.BlockSpec((1, C, l_tile), lambda bi, ti: (bi, 0, ti))
    const_spec = pl.BlockSpec((f * out_c, C), lambda bi, ti: (0, 0))
    in_specs = [x_spec]
    operands = [x]
    if skip_co:
        in_specs.append(x_spec)
        operands.append(skip)
    in_specs += [
        pl.BlockSpec((1, 1, C, 2), lambda bi, ti: (bi, ti, 0, 0)),    # halo
        const_spec, const_spec, const_spec,                           # wl/wm/wr
        pl.BlockSpec((f * out_c, 1), lambda bi, ti: (0, 0)),          # bias
        const_spec, const_spec,                                       # fixups
    ]
    operands += [halo, w_left, w_mid, w_right, bias, w_lfix, w_rfix]

    out_pm = pl.pallas_call(
        kernel,
        out_shape=jax.ShapeDtypeStruct((B, f * out_c, L), x.dtype),
        grid=(B, n_t),
        in_specs=in_specs,
        out_specs=pl.BlockSpec((1, f * out_c, l_tile), lambda bi, ti: (bi, 0, ti)),
        compiler_params=pltpu.CompilerParams(
            dimension_semantics=("parallel", "parallel"),
            vmem_limit_bytes=vmem_limit),
    )(*operands)

    # Phase-major -> PyTorch interleaved column order (layout plumbing only).
    # TODO(synk): a fused downstream consumer could read the phase-major slab
    # directly and skip this extra HBM round trip.
    return (out_pm.reshape(B, f, out_c, L)
            .transpose(0, 2, 3, 1)
            .reshape(B, out_c, L * f))


def _reference_upblock(x, skip, conv_w, conv_b, *, factor, num_resnets,
                       skip_co, last):
    """Independent pure-JAX reference (dense upsample matrix + explicit conv)."""
    B, C, L = x.shape
    f = int(factor)
    L_out = L * f
    if skip_co:
        s = skip / np.sqrt(2.0) if num_resnets > 3 else skip
        x = x + s
    u = np.zeros((L, L_out), np.float32)
    for i in range(L_out):
        src = max((i + 0.5) / f - 0.5, 0.0)
        i0 = min(int(np.floor(src)), L - 1)
        i1 = i0 + 1 if i0 < L - 1 else i0
        lam = src - i0
        u[i0, i] += 1.0 - lam
        u[i1, i] += lam
    up = jnp.einsum('bcl,lm->bcm', x, jnp.asarray(u))
    up_pad = jnp.pad(up, ((0, 0), (0, 0), (1, 1)))
    y = (jnp.einsum('oc,bcm->bom', conv_w[:, :, 0], up_pad[:, :, 0:L_out]) +
         jnp.einsum('oc,bcm->bom', conv_w[:, :, 1], up_pad[:, :, 1:L_out + 1]) +
         jnp.einsum('oc,bcm->bom', conv_w[:, :, 2], up_pad[:, :, 2:L_out + 2]))
    y = y + conv_b[None, :, None]
    if not last:
        y = jnp.maximum(y, 0.0)
    return y


if __name__ == "__main__":
    key = jax.random.PRNGKey(0)
    B, C, L = 2, 4, 16            # input  (B, in_c, L)
    out_c, factor = 4, 2          # output (B, out_c, L*factor)

    k1, k2, k3, k4, k5 = jax.random.split(key, 5)
    x = jax.random.normal(k1, (B, C, L), jnp.float32)
    skip = jax.random.normal(k2, (B, C, L), jnp.float32)
    noise_scale = jax.random.normal(k3, (B, 512), jnp.float32)

    # Conv1d(in_c=C, out_c, kernel_size=3) params, PyTorch-style uniform init.
    bound = 1.0 / np.sqrt(C * 3)
    conv_w = jax.random.uniform(k4, (out_c, C, 3), jnp.float32, -bound, bound)
    conv_b = jax.random.uniform(k5, (out_c,), jnp.float32, -bound, bound)

    ref = _reference_upblock(x, skip, conv_w, conv_b, factor=factor,
                             num_resnets=2, skip_co=True, last=False)

    # 1) Exact-math check (f32 MXU operands, single L tile).
    out_f32 = upblock_forward(x, noise_scale, skip, conv_w, conv_b,
                              factor=factor, num_resnets=2, skip_co=True,
                              last=False, compute_dtype=jnp.float32)
    jax.block_until_ready(out_f32)
    assert out_f32.shape == (B, out_c, L * factor), out_f32.shape
    np.testing.assert_allclose(np.asarray(out_f32), np.asarray(ref),
                               rtol=1e-4, atol=1e-5)

    # 2) Default bf16 MXU path (production configuration).
    out_bf16 = upblock_forward(x, noise_scale, skip, conv_w, conv_b,
                               factor=factor, num_resnets=2, skip_co=True,
                               last=False)
    jax.block_until_ready(out_bf16)
    np.testing.assert_allclose(np.asarray(out_bf16), np.asarray(ref),
                               rtol=5e-2, atol=8e-2)

    # 3) Multi-tile L path (exercises halo columns + boundary-fixup gating).
    L2 = 256
    x2 = jax.random.normal(k1, (B, C, L2), jnp.float32)
    skip2 = jax.random.normal(k2, (B, C, L2), jnp.float32)
    ref2 = _reference_upblock(x2, skip2, conv_w, conv_b, factor=factor,
                              num_resnets=2, skip_co=True, last=False)
    out2 = upblock_forward(x2, noise_scale, skip2, conv_w, conv_b,
                           factor=factor, num_resnets=2, skip_co=True,
                           last=False, compute_dtype=jnp.float32, l_tile=128)
    jax.block_until_ready(out2)
    np.testing.assert_allclose(np.asarray(out2), np.asarray(ref2),
                               rtol=1e-4, atol=1e-5)

    print("KERNEL_OK")
</pallas_src>

<mosaic_0001>
module attributes {stable_mosaic.version = 11 : i64} {
  func.func @_upblock_kernel(%arg0: i32, %arg1: i32, %arg2: memref<1x4x16xf32, #tpu.memory_space<vmem>>, %arg3: memref<1x4x16xf32, #tpu.memory_space<vmem>>, %arg4: memref<1x1x4x2xf32, #tpu.memory_space<vmem>>, %arg5: memref<8x4xf32, #tpu.memory_space<vmem>>, %arg6: memref<8x4xf32, #tpu.memory_space<vmem>>, %arg7: memref<8x4xf32, #tpu.memory_space<vmem>>, %arg8: memref<8x1xf32, #tpu.memory_space<vmem>>, %arg9: memref<8x4xf32, #tpu.memory_space<vmem>>, %arg10: memref<8x4xf32, #tpu.memory_space<vmem>>, %arg11: memref<1x8x16xf32, #tpu.memory_space<vmem>>) attributes {dimension_semantics = [#tpu.dimension_semantics<parallel>, #tpu.dimension_semantics<parallel>], iteration_bounds = array<i64: 2, 1>, scalar_prefetch = 0 : i64, scratch_operands = 0 : i64, tpu.core_type = #tpu.core_type<tc>, window_params = [{transform_indices = @transform_0, window_bounds = array<i64: 1, 4, 16>}, {transform_indices = @transform_1, window_bounds = array<i64: 1, 4, 16>}, {transform_indices = @transform_2, window_bounds = array<i64: 1, 1, 4, 2>}, {pipeline_mode = #tpu.pipeline_mode<synchronous>, transform_indices = @transform_3, window_bounds = array<i64: 8, 4>}, {pipeline_mode = #tpu.pipeline_mode<synchronous>, transform_indices = @transform_4, window_bounds = array<i64: 8, 4>}, {pipeline_mode = #tpu.pipeline_mode<synchronous>, transform_indices = @transform_5, window_bounds = array<i64: 8, 4>}, {pipeline_mode = #tpu.pipeline_mode<synchronous>, transform_indices = @transform_6, window_bounds = array<i64: 8, 1>}, {pipeline_mode = #tpu.pipeline_mode<synchronous>, transform_indices = @transform_7, window_bounds = array<i64: 8, 4>}, {pipeline_mode = #tpu.pipeline_mode<synchronous>, transform_indices = @transform_8, window_bounds = array<i64: 8, 4>}, {transform_indices = @transform_9, window_bounds = array<i64: 1, 8, 16>}]} {
    %c0_i32 = arith.constant 0 : i32
    %0 = arith.cmpi eq, %arg1, %c0_i32 : i32
    %c0_i32_0 = arith.constant 0 : i32
    %1 = arith.cmpi eq, %arg1, %c0_i32_0 : i32
    %c0 = arith.constant 0 : index
    %c0_1 = arith.constant 0 : index
    %c0_2 = arith.constant 0 : index
    %2 = vector.load %arg2[%c0, %c0_1, %c0_2] : memref<1x4x16xf32, #tpu.memory_space<vmem>>, vector<1x4x16xf32>
    %3 = vector.shape_cast %2 : vector<1x4x16xf32> to vector<4x16xf32>
    %c0_3 = arith.constant 0 : index
    %c0_4 = arith.constant 0 : index
    %c0_5 = arith.constant 0 : index
    %4 = vector.load %arg3[%c0_3, %c0_4, %c0_5] : memref<1x4x16xf32, #tpu.memory_space<vmem>>, vector<1x4x16xf32>
    %5 = vector.shape_cast %4 : vector<1x4x16xf32> to vector<4x16xf32>
    %cst = arith.constant 1.000000e+00 : f32
    %6 = vector.broadcast %cst : f32 to vector<4x16xf32>
    %7 = arith.mulf %6, %5 : vector<4x16xf32>
    %8 = arith.addf %3, %7 : vector<4x16xf32>
    %c0_6 = arith.constant 0 : index
    %c0_7 = arith.constant 0 : index
    %c0_8 = arith.constant 0 : index
    %c0_9 = arith.constant 0 : index
    %9 = vector.load %arg4[%c0_6, %c0_7, %c0_8, %c0_9] : memref<1x1x4x2xf32, #tpu.memory_space<vmem>>, vector<1x1x4x2xf32>
    %10 = vector.shape_cast %9 : vector<1x1x4x2xf32> to vector<4x2xf32>
    %11 = tpu.iota {dimensions = array<i32: 1>} : vector<4x16xi32>
    %c0_i32_10 = arith.constant 0 : i32
    %12 = vector.broadcast %c0_i32_10 : i32 to vector<4x16xi32>
    %13 = arith.cmpi eq, %11, %12 : vector<4x16xi32>
    %14 = vector.extract_strided_slice %10 {offsets = [0, 0], sizes = [4, 1], strides = [1, 1]} : vector<4x2xf32> to vector<4x1xf32>
    %c1_i32 = arith.constant 1 : i32
    %15 = tpu.dynamic_rotate %8 by %c1_i32 dim 1 : vector<4x16xf32>, i32 -> vector<4x16xf32>
    %16 = vector.shape_cast %14 : vector<4x1xf32> to vector<4x1xf32>
    %17 = vector.broadcast %16 : vector<4x1xf32> to vector<4x16xf32>
    %18 = arith.select %13, %17, %15 : vector<4x16xi1>, vector<4x16xf32>
    %c15_i32 = arith.constant 15 : i32
    %19 = vector.broadcast %c15_i32 : i32 to vector<4x16xi32>
    %20 = arith.cmpi eq, %11, %19 : vector<4x16xi32>
    %21 = vector.extract_strided_slice %10 {offsets = [0, 1], sizes = [4, 1], strides = [1, 1]} : vector<4x2xf32> to vector<4x1xf32>
    %c15_i32_11 = arith.constant 15 : i32
    %22 = tpu.dynamic_rotate %8 by %c15_i32_11 dim 1 : vector<4x16xf32>, i32 -> vector<4x16xf32>
    %23 = vector.shape_cast %21 : vector<4x1xf32> to vector<4x1xf32>
    %24 = vector.broadcast %23 : vector<4x1xf32> to vector<4x16xf32>
    %25 = arith.select %20, %24, %22 : vector<4x16xi1>, vector<4x16xf32>
    %c0_12 = arith.constant 0 : index
    %c0_13 = arith.constant 0 : index
    %26 = vector.load %arg6[%c0_12, %c0_13] : memref<8x4xf32, #tpu.memory_space<vmem>>, vector<8x4xf32>
    %cst_14 = arith.constant dense<0.000000e+00> : vector<8x16xf32>
    %27 = tpu.matmul %26, %8, %cst_14 {dimension_numbers = #tpu.dot_dimension_numbers<[1], [0], [0], [1], [0, 0, 1, 1], [], []>} : vector<8x4xf32>, vector<4x16xf32>, vector<8x16xf32> -> vector<8x16xf32>
    %c0_15 = arith.constant 0 : index
    %c0_16 = arith.constant 0 : index
    %28 = vector.load %arg5[%c0_15, %c0_16] : memref<8x4xf32, #tpu.memory_space<vmem>>, vector<8x4xf32>
    %cst_17 = arith.constant dense<0.000000e+00> : vector<8x16xf32>
    %29 = tpu.matmul %28, %18, %cst_17 {dimension_numbers = #tpu.dot_dimension_numbers<[1], [0], [0], [1], [0, 0, 1, 1], [], []>} : vector<8x4xf32>, vector<4x16xf32>, vector<8x16xf32> -> vector<8x16xf32>
    %30 = arith.addf %27, %29 : vector<8x16xf32>
    %c0_18 = arith.constant 0 : index
    %c0_19 = arith.constant 0 : index
    %31 = vector.load %arg7[%c0_18, %c0_19] : memref<8x4xf32, #tpu.memory_space<vmem>>, vector<8x4xf32>
    %cst_20 = arith.constant dense<0.000000e+00> : vector<8x16xf32>
    %32 = tpu.matmul %31, %25, %cst_20 {dimension_numbers = #tpu.dot_dimension_numbers<[1], [0], [0], [1], [0, 0, 1, 1], [], []>} : vector<8x4xf32>, vector<4x16xf32>, vector<8x16xf32> -> vector<8x16xf32>
    %33 = arith.addf %30, %32 : vector<8x16xf32>
    %34 = tpu.iota {dimensions = array<i32: 1>} : vector<8x16xi32>
    %c0_21 = arith.constant 0 : index
    %c0_22 = arith.constant 0 : index
    %35 = vector.load %arg9[%c0_21, %c0_22] : memref<8x4xf32, #tpu.memory_space<vmem>>, vector<8x4xf32>
    %36 = vector.extract_strided_slice %8 {offsets = [0, 0], sizes = [4, 1], strides = [1, 1]} : vector<4x16xf32> to vector<4x1xf32>
    %cst_23 = arith.constant dense<0.000000e+00> : vector<8x1xf32>
    %37 = tpu.matmul %35, %36, %cst_23 {dimension_numbers = #tpu.dot_dimension_numbers<[1], [0], [0], [1], [0, 0, 1, 1], [], []>} : vector<8x4xf32>, vector<4x1xf32>, vector<8x1xf32> -> vector<8x1xf32>
    %c0_24 = arith.constant 0 : index
    %c0_25 = arith.constant 0 : index
    %38 = vector.load %arg10[%c0_24, %c0_25] : memref<8x4xf32, #tpu.memory_space<vmem>>, vector<8x4xf32>
    %39 = vector.extract_strided_slice %8 {offsets = [0, 15], sizes = [4, 1], strides = [1, 1]} : vector<4x16xf32> to vector<4x1xf32>
    %cst_26 = arith.constant dense<0.000000e+00> : vector<8x1xf32>
    %40 = tpu.matmul %38, %39, %cst_26 {dimension_numbers = #tpu.dot_dimension_numbers<[1], [0], [0], [1], [0, 0, 1, 1], [], []>} : vector<8x4xf32>, vector<4x1xf32>, vector<8x1xf32> -> vector<8x1xf32>
    %c0_i32_27 = arith.constant 0 : i32
    %41 = vector.broadcast %c0_i32_27 : i32 to vector<8x16xi32>
    %42 = arith.cmpi eq, %34, %41 : vector<8x16xi32>
    %43 = vector.broadcast %0 : i1 to vector<8x16xi1>
    %44 = arith.andi %42, %43 : vector<8x16xi1>
    %cst_28 = arith.constant 0.000000e+00 : f32
    %45 = vector.shape_cast %37 : vector<8x1xf32> to vector<8x1xf32>
    %46 = vector.broadcast %45 : vector<8x1xf32> to vector<8x16xf32>
    %47 = vector.broadcast %cst_28 : f32 to vector<8x16xf32>
    %48 = arith.select %44, %46, %47 : vector<8x16xi1>, vector<8x16xf32>
    %49 = arith.subf %33, %48 : vector<8x16xf32>
    %c15_i32_29 = arith.constant 15 : i32
    %50 = vector.broadcast %c15_i32_29 : i32 to vector<8x16xi32>
    %51 = arith.cmpi eq, %34, %50 : vector<8x16xi32>
    %52 = vector.broadcast %1 : i1 to vector<8x16xi1>
    %53 = arith.andi %51, %52 : vector<8x16xi1>
    %cst_30 = arith.constant 0.000000e+00 : f32
    %54 = vector.shape_cast %40 : vector<8x1xf32> to vector<8x1xf32>
    %55 = vector.broadcast %54 : vector<8x1xf32> to vector<8x16xf32>
    %56 = vector.broadcast %cst_30 : f32 to vector<8x16xf32>
    %57 = arith.select %53, %55, %56 : vector<8x16xi1>, vector<8x16xf32>
    %58 = arith.subf %49, %57 : vector<8x16xf32>
    %c0_31 = arith.constant 0 : index
    %c0_32 = arith.constant 0 : index
    %59 = vector.load %arg8[%c0_31, %c0_32] : memref<8x1xf32, #tpu.memory_space<vmem>>, vector<8x1xf32>
    %60 = vector.broadcast %59 : vector<8x1xf32> to vector<8x16xf32>
    %61 = arith.addf %58, %60 : vector<8x16xf32>
    %cst_33 = arith.constant 0.000000e+00 : f32
    %62 = vector.broadcast %cst_33 : f32 to vector<8x16xf32>
    %63 = arith.maximumf %61, %62 : vector<8x16xf32>
    %c0_34 = arith.constant 0 : index
    %c0_35 = arith.constant 0 : index
    %c0_36 = arith.constant 0 : index
    %64 = vector.load %arg11[%c0_34, %c0_35, %c0_36] : memref<1x8x16xf32, #tpu.memory_space<vmem>>, vector<1x8x16xf32>
    %65 = vector.shape_cast %64 : vector<1x8x16xf32> to vector<8x16xf32>
    %66 = vector.shape_cast %63 : vector<8x16xf32> to vector<1x8x16xf32>
    tpu.vector_store %arg11[%c0_34, %c0_35, %c0_36], %66 {strides = array<i32>} : memref<1x8x16xf32, #tpu.memory_space<vmem>>, vector<1x8x16xf32>,
    return
  }
  func.func @transform_0(%arg0: i32, %arg1: i32) -> (i32, i32, i32) {
    %c0_i32 = arith.constant 0 : i32
    %c0_i32_0 = arith.constant 0 : i32
    return %arg0, %c0_i32, %arg1 : i32, i32, i32
  }
  func.func @transform_1(%arg0: i32, %arg1: i32) -> (i32, i32, i32) {
    %c0_i32 = arith.constant 0 : i32
    %c0_i32_0 = arith.constant 0 : i32
    return %arg0, %c0_i32, %arg1 : i32, i32, i32
  }
  func.func @transform_2(%arg0: i32, %arg1: i32) -> (i32, i32, i32, i32) {
    %c0_i32 = arith.constant 0 : i32
    %c0_i32_0 = arith.constant 0 : i32
    %c0_i32_1 = arith.constant 0 : i32
    return %arg0, %arg1, %c0_i32, %c0_i32_0 : i32, i32, i32, i32
  }
  func.func @transform_3(%arg0: i32, %arg1: i32) -> (i32, i32) {
    %c0_i32 = arith.constant 0 : i32
    %c0_i32_0 = arith.constant 0 : i32
    %c0_i32_1 = arith.constant 0 : i32
    return %c0_i32, %c0_i32_0 : i32, i32
  }
  func.func @transform_4(%arg0: i32, %arg1: i32) -> (i32, i32) {
    %c0_i32 = arith.constant 0 : i32
    %c0_i32_0 = arith.constant 0 : i32
    %c0_i32_1 = arith.constant 0 : i32
    return %c0_i32, %c0_i32_0 : i32, i32
  }
  func.func @transform_5(%arg0: i32, %arg1: i32) -> (i32, i32) {
    %c0_i32 = arith.constant 0 : i32
    %c0_i32_0 = arith.constant 0 : i32
    %c0_i32_1 = arith.constant 0 : i32
    return %c0_i32, %c0_i32_0 : i32, i32
  }
  func.func @transform_6(%arg0: i32, %arg1: i32) -> (i32, i32) {
    %c0_i32 = arith.constant 0 : i32
    %c0_i32_0 = arith.constant 0 : i32
    %c0_i32_1 = arith.constant 0 : i32
    return %c0_i32, %c0_i32_0 : i32, i32
  }
  func.func @transform_7(%arg0: i32, %arg1: i32) -> (i32, i32) {
    %c0_i32 = arith.constant 0 : i32
    %c0_i32_0 = arith.constant 0 : i32
    %c0_i32_1 = arith.constant 0 : i32
    return %c0_i32, %c0_i32_0 : i32, i32
  }
  func.func @transform_8(%arg0: i32, %arg1: i32) -> (i32, i32) {
    %c0_i32 = arith.constant 0 : i32
    %c0_i32_0 = arith.constant 0 : i32
    %c0_i32_1 = arith.constant 0 : i32
    return %c0_i32, %c0_i32_0 : i32, i32
  }
  func.func @transform_9(%arg0: i32, %arg1: i32) -> (i32, i32, i32) {
    %c0_i32 = arith.constant 0 : i32
    %c0_i32_0 = arith.constant 0 : i32
    return %arg0, %c0_i32, %arg1 : i32, i32, i32
  }
}

</mosaic_0001>

<llo_original>
// kernel: tpu_custom_call.1
$region0: #{tpu_custom_call.1}
  #allocation0 [shape = 'u32[]', space=smem, size = 0x4, offset = 0x4, fixed_abs, tag = 'smem constant byte address 0x4 - core index']
  #allocation1 [shape = 'u32[72,128]{1,0:T(1,128)}', space=vmem, size = 0x9000, scoped, tag = 'internal scratch']
  %s0 = inlined_call_operand.vmem [shape: f32[2,4,16], index: 0, kind: input, shape index: {}]
  %s1 = inlined_call_operand.vmem [shape: f32[2,4,16], index: 1, kind: input, shape index: {}]
  %s2 = inlined_call_operand.vmem [shape: f32[2,1,4,2], index: 2, kind: input, shape index: {}]
  %s3 = inlined_call_operand.vmem [shape: f32[8,4], index: 3, kind: input, shape index: {}]
  %s4 = inlined_call_operand.vmem [shape: f32[8,4], index: 4, kind: input, shape index: {}]
  %s5 = inlined_call_operand.vmem [shape: f32[8,4], index: 5, kind: input, shape index: {}]
  %s6 = inlined_call_operand.vmem [shape: f32[8,1], index: 6, kind: input, shape index: {}]
  %s7 = inlined_call_operand.vmem [shape: f32[8,4], index: 7, kind: input, shape index: {}]
  %s8 = inlined_call_operand.vmem [shape: f32[8,4], index: 8, kind: input, shape index: {}]
  %s9 = inlined_call_operand.hbm [shape: f32[2,8,16], index: 9, kind: output, shape index: {}]
  %s10 = sld [smem:[#allocation0]]
  $region69: #{tpu_custom_call.1} parent=0
    _
  %s12 = ssub.s32 1, %s10
  %s13 = scalar_select 0, %s12, %s10
  $region1: #{tpu_custom_call.1} parent=0
    #allocation2 [shape = 'u8[8192]{0}', space=vmem, size = 0x2000, scoped, tag = 'output window, operand 0']
    #allocation3 [shape = 's32[2]{0}', space=sflag, size = 0x8, scoped, tag = 'scoped memory for tpu_custom_call.1']
    %14 = vsyncpa [#allocation3], 0
    %s15 = scalar_lea.sflag [#allocation3], 1
    %16 = vsyncpa %s15, 0
    loop: start=0, step=1, limit=4
    $region2: #{tpu_custom_call.1} parent=1 // loop_pre_header
      _
    $region3: #{tpu_custom_call.1} parent=1 // loop_header
      %s18 = sphi 0, %s22
      %p19 = scmp.ge.s32.totalorder %s18, 4
      %s25 = sphi 0, %s37
      %s26 = sphi 0, %s33
      %s27 = sphi 0, %s25
      %s28 = sphi 0, %s26
      %s29 = sphi 0, %s27
      %s30 = sphi 0, %s28
      %s42 = sphi 0, %s44
      %s45 = sphi 0, %s42
      %s46 = sphi 0, %s45
      %s62 = sphi 0, %s46
      %s70 = sphi 0, %s72
      %s73 = sphi 0, %s70
      %s74 = sphi 0, %s73
      %s90 = sphi 0, %s74
      %s98 = sphi 0, %s100
      %s101 = sphi 0, %s98
      %s102 = sphi 0, %s101
      %s118 = sphi 0, %s102
      %s122 = sphi 0, %s122
      %s124 = sphi 0, %s122
      %s125 = sphi 0, %s124
      %s139 = sphi 0, %s125
      %s143 = sphi 0, %s143
      %s145 = sphi 0, %s143
      %s146 = sphi 0, %s145
      %s160 = sphi 0, %s146
      %s164 = sphi 0, %s164
      %s166 = sphi 0, %s164
      %s167 = sphi 0, %s166
      %s181 = sphi 0, %s167
      %s185 = sphi 0, %s185
      %s187 = sphi 0, %s185
      %s188 = sphi 0, %s187
      %s202 = sphi 0, %s188
      %s206 = sphi 0, %s206
      %s208 = sphi 0, %s206
      %s209 = sphi 0, %s208
      %s223 = sphi 0, %s209
      %s227 = sphi 0, %s227
      %s229 = sphi 0, %s227
      %s230 = sphi 0, %s229
      %s244 = sphi 0, %s230
      %s252 = sphi 0, %s254
      %s255 = sphi 0, %s252
      %s256 = sphi 0, %s255
      %s272 = sphi 0, %s256
    $region4: #{tpu_custom_call.1} parent=1 // loop_header_branch
      %21 = sbr.rel (%p19) target = $region8
    $region5: #{tpu_custom_call.1} parent=1 // loop_body
      %s23 = ssub.s32 %s18, 1
      %s24 = ssub.s32 %s18, 2
      %s31 = sadd.s32 1, %s26
      %p32 = scmp.ge.s32.totalorder %s31, 1
      %s33 = scalar_select %p32, 0, %s31
      %s34 = sadd.s32 1, %s25
      %s35 = scalar_select %p32, %s34, %s25
      %p36 = scmp.ge.s32.totalorder %s35, 2
      %s37 = scalar_select %p36, 0, %s35
      %s38 = ssub.s32 %s25, %s37
      %s39 = ssub.s32 %s26, %s33
      %s40 = sor.u32 %s38, %s39
      %p41 = scmp.eq.s32.totalorder %s40, 0
      %s43 = sadd.s32 %s42, 1
      %s44 = scalar_select %p41, %s42, %s43
      %p47 = pneg %p41
      %p48 = scmp.eq.s32.totalorder %s18, 1
      %p49 = por %p47, %p48
      %p50 = scmp.ne.s32.totalorder %s42, %s45
      %p51 = scmp.eq.s32.totalorder %s18, 0
      %p52 = por %p50, %p51
      %p53 = scmp.ne.s32.totalorder %s42, %s45
      %p54 = scmp.eq.s32.totalorder %s23, 1
      %p55 = por %p53, %p54
      %p56 = scmp.ne.s32.totalorder %s45, %s46
      %p57 = scmp.eq.s32.totalorder %s23, 0
      %p58 = por %p56, %p57
      %p59 = scmp.ne.s32.totalorder %s45, %s46
      %p60 = scmp.eq.s32.totalorder %s24, 1
      %p61 = por %p59, %p60
      %p63 = scmp.ne.s32.totalorder %s46, %s62
      %p64 = scmp.eq.s32.totalorder %s24, 0
      %p65 = por %p63, %p64
      %s66 = ssub.s32 %s25, %s37
      %s67 = ssub.s32 %s26, %s33
      %s68 = sor.u32 %s66, %s67
      %p69 = scmp.eq.s32.totalorder %s68, 0
      %s71 = sadd.s32 %s70, 1
      %s72 = scalar_select %p69, %s70, %s71
      %p75 = pneg %p69
      %p76 = scmp.eq.s32.totalorder %s18, 1
      %p77 = por %p75, %p76
      %p78 = scmp.ne.s32.totalorder %s70, %s73
      %p79 = scmp.eq.s32.totalorder %s18, 0
      %p80 = por %p78, %p79
      %p81 = scmp.ne.s32.totalorder %s70, %s73
      %p82 = scmp.eq.s32.totalorder %s23, 1
      %p83 = por %p81, %p82
      %p84 = scmp.ne.s32.totalorder %s73, %s74
      %p85 = scmp.eq.s32.totalorder %s23, 0
      %p86 = por %p84, %p85
      %p87 = scmp.ne.s32.totalorder %s73, %s74
      %p88 = scmp.eq.s32.totalorder %s24, 1
      %p89 = por %p87, %p88
      %p91 = scmp.ne.s32.totalorder %s74, %s90
      %p92 = scmp.eq.s32.totalorder %s24, 0
      %p93 = por %p91, %p92
      %s94 = ssub.s32 %s25, %s37
      %s95 = ssub.s32 %s26, %s33
      %s96 = sor.u32 %s94, %s95
      %p97 = scmp.eq.s32.totalorder %s96, 0
      %s99 = sadd.s32 %s98, 1
      %s100 = scalar_select %p97, %s98, %s99
      %p103 = pneg %p97
      %p104 = scmp.eq.s32.totalorder %s18, 1
      %p105 = por %p103, %p104
      %p106 = scmp.ne.s32.totalorder %s98, %s101
      %p107 = scmp.eq.s32.totalorder %s18, 0
      %p108 = por %p106, %p107
      %p109 = scmp.ne.s32.totalorder %s98, %s101
      %p110 = scmp.eq.s32.totalorder %s23, 1
      %p111 = por %p109, %p110
      %p112 = scmp.ne.s32.totalorder %s101, %s102
      %p113 = scmp.eq.s32.totalorder %s23, 0
      %p114 = por %p112, %p113
      %p115 = scmp.ne.s32.totalorder %s101, %s102
      %p116 = scmp.eq.s32.totalorder %s24, 1
      %p117 = por %p115, %p116
      %p119 = scmp.ne.s32.totalorder %s102, %s118
      %p120 = scmp.eq.s32.totalorder %s24, 0
      %p121 = por %p119, %p120
      %s123 = sadd.s32 %s122, 1
      %p126 = scmp.eq.s32.totalorder %s18, 1
      %p127 = scmp.ne.s32.totalorder %s122, %s124
      %p128 = scmp.eq.s32.totalorder %s18, 0
      %p129 = por %p127, %p128
      %p130 = scmp.ne.s32.totalorder %s122, %s124
      %p131 = scmp.eq.s32.totalorder %s23, 1
      %p132 = por %p130, %p131
      %p133 = scmp.ne.s32.totalorder %s124, %s125
      %p134 = scmp.eq.s32.totalorder %s23, 0
      %p135 = por %p133, %p134
      %p136 = scmp.ne.s32.totalorder %s124, %s125
      %p137 = scmp.eq.s32.totalorder %s24, 1
      %p138 = por %p136, %p137
      %p140 = scmp.ne.s32.totalorder %s125, %s139
      %p141 = scmp.eq.s32.totalorder %s24, 0
      %p142 = por %p140, %p141
      %s144 = sadd.s32 %s143, 1
      %p147 = scmp.eq.s32.totalorder %s18, 1
      %p148 = scmp.ne.s32.totalorder %s143, %s145
      %p149 = scmp.eq.s32.totalorder %s18, 0
      %p150 = por %p148, %p149
      %p151 = scmp.ne.s32.totalorder %s143, %s145
      %p152 = scmp.eq.s32.totalorder %s23, 1
      %p153 = por %p151, %p152
      %p154 = scmp.ne.s32.totalorder %s145, %s146
      %p155 = scmp.eq.s32.totalorder %s23, 0
      %p156 = por %p154, %p155
      %p157 = scmp.ne.s32.totalorder %s145, %s146
      %p158 = scmp.eq.s32.totalorder %s24, 1
      %p159 = por %p157, %p158
      %p161 = scmp.ne.s32.totalorder %s146, %s160
      %p162 = scmp.eq.s32.totalorder %s24, 0
      %p163 = por %p161, %p162
      %s165 = sadd.s32 %s164, 1
      %p168 = scmp.eq.s32.totalorder %s18, 1
      %p169 = scmp.ne.s32.totalorder %s164, %s166
      %p170 = scmp.eq.s32.totalorder %s18, 0
      %p171 = por %p169, %p170
      %p172 = scmp.ne.s32.totalorder %s164, %s166
      %p173 = scmp.eq.s32.totalorder %s23, 1
      %p174 = por %p172, %p173
      %p175 = scmp.ne.s32.totalorder %s166, %s167
      %p176 = scmp.eq.s32.totalorder %s23, 0
      %p177 = por %p175, %p176
      %p178 = scmp.ne.s32.totalorder %s166, %s167
      %p179 = scmp.eq.s32.totalorder %s24, 1
      %p180 = por %p178, %p179
      %p182 = scmp.ne.s32.totalorder %s167, %s181
      %p183 = scmp.eq.s32.totalorder %s24, 0
      %p184 = por %p182, %p183
      %s186 = sadd.s32 %s185, 1
      %p189 = scmp.eq.s32.totalorder %s18, 1
      %p190 = scmp.ne.s32.totalorder %s185, %s187
      %p191 = scmp.eq.s32.totalorder %s18, 0
      %p192 = por %p190, %p191
      %p193 = scmp.ne.s32.totalorder %s185, %s187
      %p194 = scmp.eq.s32.totalorder %s23, 1
      %p195 = por %p193, %p194
      %p196 = scmp.ne.s32.totalorder %s187, %s188
      %p197 = scmp.eq.s32.totalorder %s23, 0
      %p198 = por %p196, %p197
      %p199 = scmp.ne.s32.totalorder %s187, %s188
      %p200 = scmp.eq.s32.totalorder %s24, 1
      %p201 = por %p199, %p200
      %p203 = scmp.ne.s32.totalorder %s188, %s202
      %p204 = scmp.eq.s32.totalorder %s24, 0
      %p205 = por %p203, %p204
      %s207 = sadd.s32 %s206, 1
      %p210 = scmp.eq.s32.totalorder %s18, 1
      %p211 = scmp.ne.s32.totalorder %s206, %s208
      %p212 = scmp.eq.s32.totalorder %s18, 0
      %p213 = por %p211, %p212
      %p214 = scmp.ne.s32.totalorder %s206, %s208
      %p215 = scmp.eq.s32.totalorder %s23, 1
      %p216 = por %p214, %p215
      %p217 = scmp.ne.s32.totalorder %s208, %s209
      %p218 = scmp.eq.s32.totalorder %s23, 0
      %p219 = por %p217, %p218
      %p220 = scmp.ne.s32.totalorder %s208, %s209
      %p221 = scmp.eq.s32.totalorder %s24, 1
      %p222 = por %p220, %p221
      %p224 = scmp.ne.s32.totalorder %s209, %s223
      %p225 = scmp.eq.s32.totalorder %s24, 0
      %p226 = por %p224, %p225
      %s228 = sadd.s32 %s227, 1
      %p231 = scmp.eq.s32.totalorder %s18, 1
      %p232 = scmp.ne.s32.totalorder %s227, %s229
      %p233 = scmp.eq.s32.totalorder %s18, 0
      %p234 = por %p232, %p233
      %p235 = scmp.ne.s32.totalorder %s227, %s229
      %p236 = scmp.eq.s32.totalorder %s23, 1
      %p237 = por %p235, %p236
      %p238 = scmp.ne.s32.totalorder %s229, %s230
      %p239 = scmp.eq.s32.totalorder %s23, 0
      %p240 = por %p238, %p239
      %p241 = scmp.ne.s32.totalorder %s229, %s230
      %p242 = scmp.eq.s32.totalorder %s24, 1
      %p243 = por %p241, %p242
      %p245 = scmp.ne.s32.totalorder %s230, %s244
      %p246 = scmp.eq.s32.totalorder %s24, 0
      %p247 = por %p245, %p246
      %s248 = ssub.s32 %s25, %s37
      %s249 = ssub.s32 %s26, %s33
      %s250 = sor.u32 %s248, %s249
      %p251 = scmp.eq.s32.totalorder %s250, 0
      %s253 = sadd.s32 %s252, 1
      %s254 = scalar_select %p251, %s252, %s253
      %p257 = pneg %p251
      %p258 = scmp.eq.s32.totalorder %s18, 1
      %p259 = por %p257, %p258
      %p260 = scmp.ne.s32.totalorder %s252, %s255
      %p261 = scmp.eq.s32.totalorder %s18, 0
      %p262 = por %p260, %p261
      %p263 = scmp.ne.s32.totalorder %s252, %s255
      %p264 = scmp.eq.s32.totalorder %s23, 1
      %p265 = por %p263, %p264
      %p266 = scmp.ne.s32.totalorder %s255, %s256
      %p267 = scmp.eq.s32.totalorder %s23, 0
      %p268 = por %p266, %p267
      %p269 = scmp.ne.s32.totalorder %s255, %s256
      %p270 = scmp.eq.s32.totalorder %s24, 1
      %p271 = por %p269, %p270
      %p273 = scmp.ne.s32.totalorder %s256, %s272
      %p274 = scmp.eq.s32.totalorder %s24, 0
      %p275 = por %p273, %p274
      %p276 = scmp.le.s32.totalorder 1, %s18
      %p277 = scmp.lt.s32.totalorder %s18, 3
      %p278 = pnand %p276, %p277
      %p279 = pneg %p278
      // Predicated region
      $region9: #{tpu_custom_call.1} parent=5 // pred_check
        _
      $region10: #{tpu_custom_call.1} parent=5 // pred_check_branch
        %281 = sbr.rel (%p278) target = $region12
      $region11: #{tpu_custom_call.1} parent=5 // pred_region
        %s282 = ssub.s32 %s18, 1
        // Predicated region
        $region13: #{tpu_custom_call.1} parent=11 // pred_check
          %p283 = pneg %p135
        $region14: #{tpu_custom_call.1} parent=11 // pred_check_branch
          %285 = sbr.rel (%p283) target = $region16
        $region15: #{tpu_custom_call.1} parent=11 // pred_region
          _
        $region16: #{tpu_custom_call.1} parent=11 // pred_fallthru
          _
        // Predicated region
        $region17: #{tpu_custom_call.1} parent=11 // pred_check
          %p286 = pneg %p156
        $region18: #{tpu_custom_call.1} parent=11 // pred_check_branch
          %288 = sbr.rel (%p286) target = $region20
        $region19: #{tpu_custom_call.1} parent=11 // pred_region
          _
        $region20: #{tpu_custom_call.1} parent=11 // pred_fallthru
          _
        // Predicated region
        $region21: #{tpu_custom_call.1} parent=11 // pred_check
          %p289 = pneg %p177
        $region22: #{tpu_custom_call.1} parent=11 // pred_check_branch
          %291 = sbr.rel (%p289) target = $region24
        $region23: #{tpu_custom_call.1} parent=11 // pred_region
          _
        $region24: #{tpu_custom_call.1} parent=11 // pred_fallthru
          _
        // Predicated region
        $region25: #{tpu_custom_call.1} parent=11 // pred_check
          %p292 = pneg %p198
        $region26: #{tpu_custom_call.1} parent=11 // pred_check_branch
          %294 = sbr.rel (%p292) target = $region28
        $region27: #{tpu_custom_call.1} parent=11 // pred_region
          _
        $region28: #{tpu_custom_call.1} parent=11 // pred_fallthru
          _
        // Predicated region
        $region29: #{tpu_custom_call.1} parent=11 // pred_check
          %p295 = pneg %p219
        $region30: #{tpu_custom_call.1} parent=11 // pred_check_branch
          %297 = sbr.rel (%p295) target = $region32
        $region31: #{tpu_custom_call.1} parent=11 // pred_region
          _
        $region32: #{tpu_custom_call.1} parent=11 // pred_fallthru
          _
        // Predicated region
        $region33: #{tpu_custom_call.1} parent=11 // pred_check
          %p298 = pneg %p240
        $region34: #{tpu_custom_call.1} parent=11 // pred_check_branch
          %300 = sbr.rel (%p298) target = $region36
        $region35: #{tpu_custom_call.1} parent=11 // pred_region
          _
        $region36: #{tpu_custom_call.1} parent=11 // pred_fallthru
          _
      $region12: #{tpu_custom_call.1} parent=5 // pred_fallthru
        _
      %p301 = scmp.lt.s32.totalorder %s18, 2
      // Predicated region
      $region37: #{tpu_custom_call.1} parent=5 // pred_check
        %p302 = pneg %p301
      $region38: #{tpu_custom_call.1} parent=5 // pred_check_branch
        %304 = sbr.rel (%p302) target = $region40
      $region39: #{tpu_custom_call.1} parent=5 // pred_region
        // Predicated region
        $region41: #{tpu_custom_call.1} parent=39 // pred_check
          %p305 = pneg %p52
        $region42: #{tpu_custom_call.1} parent=39 // pred_check_branch
          %307 = sbr.rel (%p305) target = $region44
        $region43: #{tpu_custom_call.1} parent=39 // pred_region
          %p308 = scmp.lt.s32.totalorder %s25, 1
          %s309 = scalar_select %p308, %s25, 1
          %p310 = scmp.lt.s32.totalorder %s26, 0
          %s311 = scalar_select %p310, %s26, 0
          %s312 = sadd.s32 %s311, %s309
          %s313 = smul.addr %s312, 4
          %s314 = scalar_lea.vmem %s0, %s313
        $region44: #{tpu_custom_call.1} parent=39 // pred_fallthru
          _
        // Predicated region
        $region45: #{tpu_custom_call.1} parent=39 // pred_check
          %p315 = pneg %p80
        $region46: #{tpu_custom_call.1} parent=39 // pred_check_branch
          %317 = sbr.rel (%p315) target = $region48
        $region47: #{tpu_custom_call.1} parent=39 // pred_region
          %p318 = scmp.lt.s32.totalorder %s25, 1
          %s319 = scalar_select %p318, %s25, 1
          %p320 = scmp.lt.s32.totalorder %s26, 0
          %s321 = scalar_select %p320, %s26, 0
          %s322 = sadd.s32 %s321, %s319
          %s323 = smul.addr %s322, 4
          %s324 = scalar_lea.vmem %s1, %s323
        $region48: #{tpu_custom_call.1} parent=39 // pred_fallthru
          _
        // Predicated region
        $region49: #{tpu_custom_call.1} parent=39 // pred_check
          %p325 = pneg %p108
        $region50: #{tpu_custom_call.1} parent=39 // pred_check_branch
          %327 = sbr.rel (%p325) target = $region52
        $region51: #{tpu_custom_call.1} parent=39 // pred_region
          %p328 = scmp.lt.s32.totalorder %s25, 1
          %s329 = scalar_select %p328, %s25, 1
          %p330 = scmp.lt.s32.totalorder %s26, 0
          %s331 = scalar_select %p330, %s26, 0
          %s332 = sadd.s32 %s331, %s329
          %s333 = smul.addr %s332, 4
          %s334 = scalar_lea.vmem %s2, %s333
        $region52: #{tpu_custom_call.1} parent=39 // pred_fallthru
          _
      $region40: #{tpu_custom_call.1} parent=5 // pred_fallthru
        _
      %p335 = scmp.le.s32.totalorder 1, %s18
      %p336 = scmp.lt.s32.totalorder %s18, 3
      %p337 = pnand %p335, %p336
      %p338 = pneg %p337
      // Predicated region
      $region53: #{tpu_custom_call.1} parent=5 // pred_check
        _
      $region54: #{tpu_custom_call.1} parent=5 // pred_check_branch
        %340 = sbr.rel (%p337) target = $region56
      $region55: #{tpu_custom_call.1} parent=5 // pred_region
        %s341 = ssub.s32 %s18, 1
        %p342 = scmp.lt.s32.totalorder %s27, 1
        %s343 = scalar_select %p342, %s27, 1
        %p344 = scmp.lt.s32.totalorder %s28, 0
        %s345 = scalar_select %p344, %s28, 0
        %s346 = sadd.s32 %s345, %s343
        %s347 = smul.addr %s346, 4
        %s348 = scalar_lea.vmem %s0, %s347
        %p349 = pneg %p58
        %p350 = pneg %p55
        %p351 = scmp.lt.s32.totalorder %s27, 1
        %s352 = scalar_select %p351, %s27, 1
        %p353 = scmp.lt.s32.totalorder %s28, 0
        %s354 = scalar_select %p353, %s28, 0
        %s355 = sadd.s32 %s354, %s352
        %s356 = smul.addr %s355, 4
        %s357 = scalar_lea.vmem %s1, %s356
        %p358 = pneg %p86
        %p359 = pneg %p83
        %p360 = scmp.lt.s32.totalorder %s27, 1
        %s361 = scalar_select %p360, %s27, 1
        %p362 = scmp.lt.s32.totalorder %s28, 0
        %s363 = scalar_select %p362, %s28, 0
        %s364 = sadd.s32 %s363, %s361
        %s365 = smul.addr %s364, 4
        %s366 = scalar_lea.vmem %s2, %s365
        %p367 = pneg %p114
        %p368 = pneg %p111
        %p369 = pneg %p135
        %p370 = pneg %p132
        %p371 = pneg %p156
        %p372 = pneg %p153
        %p373 = pneg %p177
        %p374 = pneg %p174
        %p375 = pneg %p198
        %p376 = pneg %p195
        %p377 = pneg %p219
        %p378 = pneg %p216
        %p379 = pneg %p240
        %p380 = pneg %p237
        %p381 = pneg %p268
        %p382 = pneg %p265
        %s383 = sand.u32 %s255, 1
        %s384 = scalar_lea.sflag [#allocation3], %s383
        %s385 = sand.u32 %s255, 1
        %s386 = smul.addr %s385, 8
        %s387 = scalar_lea.vmem [#allocation2], %s386
        %p388 = scmp.lt.s32.totalorder %s27, 1
        %s389 = scalar_select %p388, %s27, 1
        %p390 = scmp.lt.s32.totalorder %s28, 0
        %s391 = scalar_select %p390, %s28, 0
        %s392 = sadd.s32 %s391, %s389
        %s393 = smul.addr %s392, 4
        %s394 = scalar_lea.vmem %s0, %s393
        %p395 = scmp.lt.s32.totalorder %s27, 1
        %s396 = scalar_select %p395, %s27, 1
        %p397 = scmp.lt.s32.totalorder %s28, 0
        %s398 = scalar_select %p397, %s28, 0
        %s399 = sadd.s32 %s398, %s396
        %s400 = smul.addr %s399, 4
        %s401 = scalar_lea.vmem %s1, %s400
        %p402 = scmp.lt.s32.totalorder %s27, 1
        %s403 = scalar_select %p402, %s27, 1
        %p404 = scmp.lt.s32.totalorder %s28, 0
        %s405 = scalar_select %p404, %s28, 0
        %s406 = sadd.s32 %s405, %s403
        %s407 = smul.addr %s406, 4
        %s408 = scalar_lea.vmem %s2, %s407
        %p409 = scmp.eq.s32.totalorder %s28, 0
        %v410 = vld [vmem:[%s394] sm:$0xf]
        %v411 = vld [vmem:[%s401] sm:$0xf]
        %v412 = vadd.f32 %v410, %v411
        %v413 = vld [vmem:[%s408] sm:$0xf]
        %v414 = vlaneseq
        %v415 = vand.u32 %v414, 127
        %vm416 = vcmp.eq.s32.totalorder %v415, 0
        %vm417 = vcmask 1047680
        %418 = vrot.lane.b32.xlu0 %v412, 16
        %v419 = vpop.permute.xlu0 %418
        %v420 = vsel %vm417, %v419, %v412
        %421 = vrot.lane.b32.xlu0 %v420, 16
        %v422 = vpop.permute.xlu0 %421
        %v423 = vsel %vm417, %v422, %v412
        %425 = vset.pattern.permute.xlu0 0
        %426 = vperm.xlu0 %425, %v413
        %v427 = vpop.permute.xlu0 %426
        %430 = vrot.lane.b32.xlu0 %v423, 113
        %v431 = vpop.permute.xlu0 %430
        %v433 = vsel %vm416, %v427, %v431
        %vm434 = vcmp.eq.s32.totalorder %v415, 15
        %435 = vset.pattern.permute.xlu0 1
        %436 = vperm.xlu0 %435, %v413
        %v437 = vpop.permute.xlu0 %436
        %439 = vrot.lane.b32.xlu0 %v423, 127
        %v440 = vpop.permute.xlu0 %439
        %v442 = vsel %vm434, %v437, %v440
        %v443 = vld [vmem:[%s4] sm:$0xff]
        %v444 = vld [vmem:[%s3] sm:$0xff]
        %vm445 = vcmask 31744
        %v447 = vsel %vm445, %v444, 0
        %vm449 = vcmask 1043456
        %v451 = vsel %vm449, %v433, 0
        %453 = vmatpush.msra.mxu0 0.0
        %454 = vmatpush.msra.mxu0 0.0
        %455 = vmatpush.msra.mxu0 0.0
        %456 = vmatpush.msra.mxu0 0.0
        %457 = vmatpush.msra.mxu0 0.0
        %458 = vmatpush.msra.mxu0 0.0
        %459 = vmatpush.msra.mxu0 0.0
        %460 = vmatpush.msra.mxu0 0.0
        %461 = vmatpush.msra.mxu0 0.0
        %462 = vmatpush.msra.mxu0 0.0
        %463 = vmatpush.msra.mxu0 0.0
        %464 = vmatpush.msra.mxu0 0.0
        %465 = vmatpush.msra.mxu0 0.0
        %466 = vmatpush.msra.mxu0 0.0
        %467 = vmatpush.msra.mxu0 0.0
        %468 = vmatpush.msra.mxu0 %v451
        %469 = vmatmul.f32.gmra.mxu0 %v447
        %v470 = vpop.f32.mrf.mxu0
        %v471 = vadd.f32 0.0, %v470
        %472 = vdwg.mxu0
        %v474 = vsel %vm445, %v443, 0
        %v477 = vsel %vm449, %v412, 0
        %479 = vmatpush.msra.mxu0 0.0
        %480 = vmatpush.msra.mxu0 0.0
        %481 = vmatpush.msra.mxu0 0.0
        %482 = vmatpush.msra.mxu0 0.0
        %483 = vmatpush.msra.mxu0 0.0
        %484 = vmatpush.msra.mxu0 0.0
        %485 = vmatpush.msra.mxu0 0.0
        %486 = vmatpush.msra.mxu0 0.0
        %487 = vmatpush.msra.mxu0 0.0
        %488 = vmatpush.msra.mxu0 0.0
        %489 = vmatpush.msra.mxu0 0.0
        %490 = vmatpush.msra.mxu0 0.0
        %491 = vmatpush.msra.mxu0 0.0
        %492 = vmatpush.msra.mxu0 0.0
        %493 = vmatpush.msra.mxu0 0.0
        %494 = vmatpush.msra.mxu0 %v477
        %495 = vmatmul.f32.gmra.mxu0 %v474
        %v496 = vpop.f32.mrf.mxu0
        %v497 = vadd.f32 %v471, %v496
        %498 = vdwg.mxu0
        %v499 = vld [vmem:[%s5] sm:$0xff]
        %v501 = vsel %vm445, %v499, 0
        %v504 = vsel %vm449, %v442, 0
        %506 = vmatpush.msra.mxu0 0.0
        %507 = vmatpush.msra.mxu0 0.0
        %508 = vmatpush.msra.mxu0 0.0
        %509 = vmatpush.msra.mxu0 0.0
        %510 = vmatpush.msra.mxu0 0.0
        %511 = vmatpush.msra.mxu0 0.0
        %512 = vmatpush.msra.mxu0 0.0
        %513 = vmatpush.msra.mxu0 0.0
        %514 = vmatpush.msra.mxu0 0.0
        %515 = vmatpush.msra.mxu0 0.0
        %516 = vmatpush.msra.mxu0 0.0
        %517 = vmatpush.msra.mxu0 0.0
        %518 = vmatpush.msra.mxu0 0.0
        %519 = vmatpush.msra.mxu0 0.0
        %520 = vmatpush.msra.mxu0 0.0
        %521 = vmatpush.msra.mxu0 %v504
        %522 = vmatmul.f32.gmra.mxu0 %v501
        %v523 = vpop.f32.mrf.mxu0
        %v524 = vadd.f32 0.0, %v523
        %525 = vdwg.mxu0
        %v526 = vadd.f32 %v497, %v524
        %v527 = vld [vmem:[%s7] sm:$0xff]
        %v529 = vsel %vm445, %v527, 0
        %531 = vmatpush.msra.mxu0 0.0
        %532 = vmatpush.msra.mxu0 0.0
        %533 = vmatpush.msra.mxu0 0.0
        %534 = vmatpush.msra.mxu0 0.0
        %535 = vmatpush.msra.mxu0 0.0
        %536 = vmatpush.msra.mxu0 0.0
        %537 = vmatpush.msra.mxu0 0.0
        %538 = vmatpush.msra.mxu0 0.0
        %539 = vmatpush.msra.mxu0 0.0
        %540 = vmatpush.msra.mxu0 0.0
        %541 = vmatpush.msra.mxu0 0.0
        %542 = vmatpush.msra.mxu0 0.0
        %543 = vmatpush.msra.mxu0 0.0
        %544 = vmatpush.msra.mxu0 0.0
        %545 = vmatpush.msra.mxu0 0.0
        %546 = vmatpush.msra.mxu0 %v477
        %547 = vmatmul.f32.gmra.mxu0 %v529
        %v548 = vpop.f32.mrf.mxu0
        %v549 = vadd.f32 0.0, %v548
        %550 = vdwg.mxu0
        %v551 = vld [vmem:[%s8] sm:$0xff]
        %552 = vrot.lane.b32.xlu0 %v412, 113
        %v553 = vpop.permute.xlu0 %552
        %v555 = vsel %vm445, %v551, 0
        %v557 = vsel %vm449, %v553, 0
        %559 = vmatpush.msra.mxu0 0.0
        %560 = vmatpush.msra.mxu0 0.0
        %561 = vmatpush.msra.mxu0 0.0
        %562 = vmatpush.msra.mxu0 0.0
        %563 = vmatpush.msra.mxu0 0.0
        %564 = vmatpush.msra.mxu0 0.0
        %565 = vmatpush.msra.mxu0 0.0
        %566 = vmatpush.msra.mxu0 0.0
        %567 = vmatpush.msra.mxu0 0.0
        %568 = vmatpush.msra.mxu0 0.0
        %569 = vmatpush.msra.mxu0 0.0
        %570 = vmatpush.msra.mxu0 0.0
        %571 = vmatpush.msra.mxu0 0.0
        %572 = vmatpush.msra.mxu0 0.0
        %573 = vmatpush.msra.mxu0 0.0
        %574 = vmatpush.msra.mxu0 %v557
        %575 = vmatmul.f32.gmra.mxu0 %v555
        %v576 = vpop.f32.mrf.mxu0
        %v577 = vadd.f32 0.0, %v576
        %578 = vdwg.mxu0
        %s579 = scalar_select %p409, 1, 0
        %v580 = vstv %s579
        %vm581 = vcmp.eq.s32.totalorder %v580, 1
        %vm582 = vmand %vm416, %vm581
        %584 = vset.pattern.permute.xlu0 0
        %585 = vperm.xlu0 %584, %v549
        %v586 = vpop.permute.xlu0 %585
        %v588 = vsel %vm582, %v586, 0.0
        %v589 = vsub.f32 %v526, %v588
        %vm590 = vmand %vm434, %vm581
        %592 = vset.pattern.permute.xlu0 0
        %593 = vperm.xlu0 %592, %v577
        %v594 = vpop.permute.xlu0 %593
        %v596 = vsel %vm590, %v594, 0.0
        %v597 = vsub.f32 %v589, %v596
        %v598 = vld [vmem:[%s6] sm:$0xff]
        %600 = vset.pattern.permute.xlu0 0
        %601 = vperm.xlu0 %600, %v598
        %v602 = vpop.permute.xlu0 %601
        %v604 = vadd.f32 %v597, %v602
        %v605 = vmax.f32 %v604, 0.0
        %vm606 = vcmask 130048
        %607 = vst.msk [vmem:[%s387] sm:$0xff] %vm606, %v605
        %s608 = sand.u32 %s255, 1
        %s609 = scalar_lea.sflag [#allocation3], %s608
        %s610 = sand.u32 %s255, 1
        %s611 = smul.addr %s610, 8
        %s612 = scalar_lea.vmem [#allocation2], %s611
        // Predicated region
        $region57: #{tpu_custom_call.1} parent=55 // pred_check
          %p613 = pneg %p265
        $region58: #{tpu_custom_call.1} parent=55 // pred_check_branch
          %615 = sbr.rel (%p613) target = $region60
        $region59: #{tpu_custom_call.1} parent=55 // pred_region
          %617 = vsyncadd %s609, 0
          %s618 = sadd.s32 %s28, %s27
          %s619 = smul.addr %s618, 8
          %s620 = scalar_lea.hbm %s9, %s619
          %s622 = sshll.u32 %s612, 4
          %s623 = int_to_ptr.vmem [resolvable:$true] %s622
          %s624 = sshll.u32 %s620, 4
          %s625 = int_to_ptr.hbm [resolvable:$true] %s624
          %627 = dma.vmem_to_hbm [thread:$0]  %s623, 128, %s625, %s609
        $region60: #{tpu_custom_call.1} parent=55 // pred_fallthru
          _
      $region56: #{tpu_custom_call.1} parent=5 // pred_fallthru
        _
      %p628 = scmp.le.s32.totalorder 2, %s18
      // Predicated region
      $region61: #{tpu_custom_call.1} parent=5 // pred_check
        %p629 = pneg %p628
      $region62: #{tpu_custom_call.1} parent=5 // pred_check_branch
        %631 = sbr.rel (%p629) target = $region64
      $region63: #{tpu_custom_call.1} parent=5 // pred_region
        %s632 = ssub.s32 %s18, 2
        // Predicated region
        $region65: #{tpu_custom_call.1} parent=63 // pred_check
          %p633 = pneg %p271
        $region66: #{tpu_custom_call.1} parent=63 // pred_check_branch
          %635 = sbr.rel (%p633) target = $region68
        $region67: #{tpu_custom_call.1} parent=63 // pred_region
          %s636 = sand.u32 %s256, 1
          %s637 = scalar_lea.sflag [#allocation3], %s636
          %s638 = sand.u32 %s256, 1
          %s639 = smul.addr %s638, 8
          %s640 = scalar_lea.vmem [#allocation2], %s639
          %642 = dma.done %s637, 128
        $region68: #{tpu_custom_call.1} parent=63 // pred_fallthru
          _
      $region64: #{tpu_custom_call.1} parent=5 // pred_fallthru
        _
    $region6: #{tpu_custom_call.1} parent=1 // loop_footer
      %s22 = sadd.s32 1, %s18
    $region7: #{tpu_custom_call.1} parent=1 // loop_footer_branch
      %17 = sbr.rel target = $region3
    $region8: #{tpu_custom_call.1} parent=1 // loop_exit
      _
    %643 = vsyncpa [#allocation3], 1
    %s644 = scalar_lea.sflag [#allocation3], 1
    %645 = vsyncpa %s644, 1

</llo_original>
